<compile_context>
chip_gen: v6e
topology: v6e:2x2x1
jax: 0.10.0
libtpu: 0.0.40
codegen_flags: <defaults>
</compile_context>

<pallas_src>
import functools

import jax
import jax.numpy as jnp
from jax.experimental import pallas as pl
from jax.experimental.pallas import tpu as pltpu

EPS = 1e-5  # nn.BatchNorm1d default eps


def conv_bn_relu_kernel(x_ref, w_ref, gamma_ref, beta_ref, o_ref,
                        xpad_ref, rhs_ref, sum_ref, sumsq_ref,
                        scale_ref, shift_ref,
                        *, K, stride, pad, L, L_out, NB, inv_m):
    # x_ref:     (NB, C_in, L)           raw (unpadded) input batches
    # w_ref:     (cout_tile, K*C_in)     fused weight slab (tap-major columns)
    # gamma/beta:(cout_tile, 1)          BN affine params
    # o_ref:     (NB, cout_tile, L_out)  output tile (lane dim = L_out)
    # xpad_ref:  (NB, C_in, L_pad)       replicate-padded staging (VMEM)
    # rhs_ref:   (K*C_in, NB*L_out)      fused im2col RHS (VMEM)
    # scratch:   per-channel sum / sumsq / folded BN scale / shift
    p = pl.program_id(1)   # 0 = stats pass, 1 = normalize + write pass
    n = pl.program_id(2)   # batch-block index
    c_in = x_ref.shape[1]
    mm = xpad_ref.dtype

    # ---- stage replicate-padded rows in VMEM (no HBM pad copy) ----
    for b in range(NB):                       # NB is a small static constant
        xv = x_ref[b].astype(mm)              # (C_in, L)
        xpad_ref[b, :, pl.ds(pad, L)] = xv
        if pad > 0:
            xpad_ref[b, :, pl.ds(0, pad)] = jnp.broadcast_to(
                xv[:, :1], (c_in, pad))
            xpad_ref[b, :, pl.ds(pad + L, pad)] = jnp.broadcast_to(
                xv[:, L - 1:L], (c_in, pad))

    # ---- assemble fused im2col RHS: rows = (tap, channel), lanes = (b, j) ----
    for b in range(NB):
        for k in range(K):
            if stride == 1:
                slab = xpad_ref[b, :, pl.ds(k, L_out)]
            else:
                # de-interleaved strided read straight from the padded buffer
                slab = xpad_ref[b, :, pl.ds(k, L_out, stride=stride)]
            rhs_ref[pl.ds(k * c_in, c_in), pl.ds(b * L_out, L_out)] = slab

    # ---- one deep MXU matmul per grid step (contraction = K*C_in) ----
    acc = jnp.dot(w_ref[...], rhs_ref[...],
                  preferred_element_type=jnp.float32)  # (cout_tile, NB*L_out)

    # ---- pass 0: accumulate per-channel batch statistics ----
    @pl.when(jnp.logical_and(p == 0, n == 0))
    def _init():
        sum_ref[...] = jnp.zeros_like(sum_ref)
        sumsq_ref[...] = jnp.zeros_like(sumsq_ref)
        o_ref[...] = jnp.zeros_like(o_ref)   # parked output block stays defined

    @pl.when(p == 0)
    def _accum():
        # TODO(synk): E[x^2]-E[x]^2 in a single f32 accumulator can cancel for
        # very large N*L_out; switch to compensated accumulation if needed.
        sum_ref[...] += jnp.sum(acc, axis=1, keepdims=True)
        sumsq_ref[...] += jnp.sum(acc * acc, axis=1, keepdims=True)

    # ---- pass 1: finalize BN scale/shift once, then normalize + ReLU ----
    @pl.when(jnp.logical_and(p == 1, n == 0))
    def _finalize():
        mean = sum_ref[...] * inv_m
        var = jnp.maximum(sumsq_ref[...] * inv_m - mean * mean, 0.0)
        scale = gamma_ref[...] * jax.lax.rsqrt(var + EPS)     # EUP rsqrt
        scale_ref[...] = scale
        shift_ref[...] = beta_ref[...] - mean * scale

    @pl.when(p == 1)
    def _write():
        y = jnp.maximum(acc * scale_ref[...] + shift_ref[...], 0.0)
        for b in range(NB):
            o_ref[b] = y[:, b * L_out:(b + 1) * L_out].astype(o_ref.dtype)


def conv_block_forward(x, weight, bias, gamma, beta, *, stride,
                       matmul_dtype=jnp.float32, cout_tile=None,
                       max_nb=8, vmem_budget_bytes=24 << 20):
    """x: (N, C_in, L) -> (N, C_out, L_out).  Matches ConvBlock.forward
    (Conv1d with replicate padding + train-mode BatchNorm + ReLU).

    matmul_dtype=jnp.bfloat16 is recommended on v6e/v7x (halves the dominant
    x HBM stream, native MXU rate); f32 stays available for exactness."""
    del bias  # per-channel conv bias is cancelled exactly by BN mean subtraction

    N, C_in, L = x.shape
    C_out, _, K = weight.shape
    pad = K // 2
    L_pad = L + 2 * pad
    L_out = (L_pad - K) // stride + 1
    out_dtype = x.dtype

    # Fused weights: (C_out, C_in, K) -> (C_out, K, C_in) -> (C_out, K*C_in)
    # so column k*C_in + c matches RHS row k*C_in + c.
    w = jnp.transpose(weight, (0, 2, 1)).reshape(C_out, K * C_in).astype(matmul_dtype)
    gamma2 = gamma.reshape(C_out, 1).astype(jnp.float32)
    beta2 = beta.reshape(C_out, 1).astype(jnp.float32)

    # C_out tile: fill the 256-deep v6e/v7x MXU; BN stats are per-channel so a
    # C_out-tiled grid keeps them local.  (On v7x, pass cout_tile=C_out//2 for
    # small C_out if you want both TensorCores busy; 128 is the natural cap on
    # v5e's 128x128 MXU.)
    if cout_tile is None:
        if C_out <= 256:
            cout_tile = C_out
        elif C_out % 256 == 0:
            cout_tile = 256
        else:
            cout_tile = 128
    assert C_out % cout_tile == 0, "C_out must be divisible by cout_tile"
    n_ct = C_out // cout_tile

    # Batches per grid step: amortize per-step overhead; keep the (roughly
    # double-buffered) working set under a conservative VMEM budget.
    mm_bytes = jnp.dtype(matmul_dtype).itemsize
    out_bytes = jnp.dtype(out_dtype).itemsize
    x_bytes = jnp.dtype(x.dtype).itemsize
    per_batch = (C_in * L * x_bytes                      # x block
                 + C_in * L_pad * mm_bytes               # padded staging
                 + K * C_in * L_out * mm_bytes           # fused RHS slab
                 + cout_tile * L_out * (4 + out_bytes))  # f32 acc + out block
    fixed = cout_tile * K * C_in * mm_bytes + 16 * cout_tile
    NB = 1
    for cand in range(1, min(N, max_nb) + 1):
        if N % cand == 0 and 2 * cand * per_batch + fixed <= vmem_budget_bytes:
            NB = cand
    inv_m = 1.0 / float(N * L_out)

    kernel = functools.partial(conv_bn_relu_kernel, K=K, stride=stride,
                               pad=pad, L=L, L_out=L_out, NB=NB, inv_m=inv_m)

    # Output index map: during pass 0 stay parked on block (0, c, 0) (which the
    # kernel zero-initializes); pass 1 writes block (n, c, 0).  The parked block
    # is rewritten with real data at (p=1, n=0) before its index ever changes,
    # so only finalized data is flushed to HBM.
    return pl.pallas_call(
        kernel,
        out_shape=jax.ShapeDtypeStruct((N, C_out, L_out), out_dtype),
        grid_spec=pltpu.PrefetchScalarGridSpec(
            num_scalar_prefetch=0,
            grid=(n_ct, 2, N // NB),
            in_specs=[
                pl.BlockSpec((NB, C_in, L), lambda c, p, n: (n, 0, 0)),
                pl.BlockSpec((cout_tile, K * C_in), lambda c, p, n: (c, 0)),
                pl.BlockSpec((cout_tile, 1), lambda c, p, n: (c, 0)),
                pl.BlockSpec((cout_tile, 1), lambda c, p, n: (c, 0)),
            ],
            out_specs=pl.BlockSpec((NB, cout_tile, L_out),
                                   lambda c, p, n: (n * p, c, 0)),
            scratch_shapes=[
                pltpu.VMEM((NB, C_in, L_pad), matmul_dtype),       # padded x
                pltpu.VMEM((K * C_in, NB * L_out), matmul_dtype),  # fused RHS
                pltpu.VMEM((cout_tile, 1), jnp.float32),           # sum
                pltpu.VMEM((cout_tile, 1), jnp.float32),           # sum of sq
                pltpu.VMEM((cout_tile, 1), jnp.float32),           # BN scale
                pltpu.VMEM((cout_tile, 1), jnp.float32),           # BN shift
            ],
        ),
        compiler_params=pltpu.CompilerParams(
            dimension_semantics=("parallel", "arbitrary", "arbitrary"),
            vmem_limit_bytes=32 << 20,
        ),
    )(x, w, gamma2, beta2)


def conv_block_ref(x, weight, bias, gamma, beta, *, stride):
    """Pure-JAX reference with identical semantics (train-mode BN)."""
    K = weight.shape[-1]
    pad = K // 2
    xp = jnp.pad(x, ((0, 0), (0, 0), (pad, pad)), mode="edge")
    y = jax.lax.conv_general_dilated(
        xp, weight, window_strides=(stride,), padding="VALID",
        dimension_numbers=("NCH", "OIH", "NCH"),
    )
    y = y + bias[None, :, None]
    mean = jnp.mean(y, axis=(0, 2), keepdims=True)
    var = jnp.mean((y - mean) ** 2, axis=(0, 2), keepdims=True)
    y = (y - mean) * (gamma[None, :, None] * jax.lax.rsqrt(var + EPS)) \
        + beta[None, :, None]
    return jnp.maximum(y, 0.0)


if __name__ == "__main__":
    # ConvBlock(in_channels=4, out_channels=8, kernel_size=3, stride=1)
    # applied to x of shape (N=2, C_in=4, L=16).
    N, C_in, L = 2, 4, 16
    C_out, K, stride = 8, 3, 1

    key = jax.random.PRNGKey(0)
    kx, kw, kb, kg, kbt = jax.random.split(key, 5)
    x = jax.random.normal(kx, (N, C_in, L), dtype=jnp.float32)
    weight = 0.1 * jax.random.normal(kw, (C_out, C_in, K), dtype=jnp.float32)
    bias = 0.1 * jax.random.normal(kb, (C_out,), dtype=jnp.float32)
    gamma = 1.0 + 0.05 * jax.random.normal(kg, (C_out,), dtype=jnp.float32)
    beta = 0.05 * jax.random.normal(kbt, (C_out,), dtype=jnp.float32)

    ref = conv_block_ref(x, weight, bias, gamma, beta, stride=stride)

    # f32 matmul operands: exact-semantics check.
    out = conv_block_forward(x, weight, bias, gamma, beta, stride=stride,
                             matmul_dtype=jnp.float32)
    out = jax.block_until_ready(out)
    assert out.shape == (N, C_out, L), out.shape
    assert jnp.allclose(out, ref, rtol=1e-4, atol=1e-4), \
        float(jnp.max(jnp.abs(out - ref)))

    # bf16 matmul operands (v6e/v7x MXU feed): looser tolerance.
    out_bf16 = conv_block_forward(x, weight, bias, gamma, beta, stride=stride,
                                  matmul_dtype=jnp.bfloat16)
    out_bf16 = jax.block_until_ready(out_bf16)
    assert jnp.allclose(out_bf16, ref, rtol=5e-2, atol=5e-2), \
        float(jnp.max(jnp.abs(out_bf16 - ref)))

    print("KERNEL_OK")
</pallas_src>

<mosaic_0001>
module attributes {stable_mosaic.version = 11 : i64} {
  func.func @conv_bn_relu_kernel(%arg0: i32, %arg1: i32, %arg2: i32, %arg3: memref<2x4x16xf32, #tpu.memory_space<vmem>>, %arg4: memref<8x12xf32, #tpu.memory_space<vmem>>, %arg5: memref<8x1xf32, #tpu.memory_space<vmem>>, %arg6: memref<8x1xf32, #tpu.memory_space<vmem>>, %arg7: memref<2x8x16xf32, #tpu.memory_space<vmem>>, %arg8: memref<2x4x18xf32, #tpu.memory_space<vmem>>, %arg9: memref<12x32xf32, #tpu.memory_space<vmem>>, %arg10: memref<8x1xf32, #tpu.memory_space<vmem>>, %arg11: memref<8x1xf32, #tpu.memory_space<vmem>>, %arg12: memref<8x1xf32, #tpu.memory_space<vmem>>, %arg13: memref<8x1xf32, #tpu.memory_space<vmem>>) attributes {dimension_semantics = [#tpu.dimension_semantics<parallel>, #tpu.dimension_semantics<arbitrary>, #tpu.dimension_semantics<arbitrary>], iteration_bounds = array<i64: 1, 2, 1>, scalar_prefetch = 0 : i64, scratch_operands = 6 : i64, tpu.core_type = #tpu.core_type<tc>, window_params = [{transform_indices = @transform_0, window_bounds = array<i64: 2, 4, 16>}, {transform_indices = @transform_1, window_bounds = array<i64: 8, 12>}, {transform_indices = @transform_2, window_bounds = array<i64: 8, 1>}, {transform_indices = @transform_3, window_bounds = array<i64: 8, 1>}, {transform_indices = @transform_4, window_bounds = array<i64: 2, 8, 16>}]} {
    %c0 = arith.constant 0 : index
    %c0_0 = arith.constant 0 : index
    %c0_1 = arith.constant 0 : index
    %0 = vector.load %arg3[%c0, %c0_0, %c0_1] : memref<2x4x16xf32, #tpu.memory_space<vmem>>, vector<1x4x16xf32>
    %1 = vector.shape_cast %0 : vector<1x4x16xf32> to vector<4x16xf32>
    %c0_2 = arith.constant 0 : index
    %c0_3 = arith.constant 0 : index
    %c1 = arith.constant 1 : index
    %2 = vector.load %arg8[%c0_2, %c0_3, %c1] : memref<2x4x18xf32, #tpu.memory_space<vmem>>, vector<1x4x16xf32>
    %3 = vector.shape_cast %2 : vector<1x4x16xf32> to vector<4x16xf32>
    %4 = vector.shape_cast %1 : vector<4x16xf32> to vector<1x4x16xf32>
    tpu.vector_store %arg8[%c0_2, %c0_3, %c1], %4 {strides = array<i32>} : memref<2x4x18xf32, #tpu.memory_space<vmem>>, vector<1x4x16xf32>,
    %5 = vector.extract_strided_slice %1 {offsets = [0, 0], sizes = [4, 1], strides = [1, 1]} : vector<4x16xf32> to vector<4x1xf32>
    %c0_4 = arith.constant 0 : index
    %c0_5 = arith.constant 0 : index
    %c0_6 = arith.constant 0 : index
    %6 = vector.load %arg8[%c0_4, %c0_5, %c0_6] : memref<2x4x18xf32, #tpu.memory_space<vmem>>, vector<1x4x1xf32>
    %7 = vector.shape_cast %6 : vector<1x4x1xf32> to vector<4x1xf32>
    %8 = vector.shape_cast %5 : vector<4x1xf32> to vector<1x4x1xf32>
    tpu.vector_store %arg8[%c0_4, %c0_5, %c0_6], %8 {strides = array<i32>} : memref<2x4x18xf32, #tpu.memory_space<vmem>>, vector<1x4x1xf32>,
    %9 = vector.extract_strided_slice %1 {offsets = [0, 15], sizes = [4, 1], strides = [1, 1]} : vector<4x16xf32> to vector<4x1xf32>
    %c0_7 = arith.constant 0 : index
    %c0_8 = arith.constant 0 : index
    %c17 = arith.constant 17 : index
    %10 = vector.load %arg8[%c0_7, %c0_8, %c17] : memref<2x4x18xf32, #tpu.memory_space<vmem>>, vector<1x4x1xf32>
    %11 = vector.shape_cast %10 : vector<1x4x1xf32> to vector<4x1xf32>
    %12 = vector.shape_cast %9 : vector<4x1xf32> to vector<1x4x1xf32>
    tpu.vector_store %arg8[%c0_7, %c0_8, %c17], %12 {strides = array<i32>} : memref<2x4x18xf32, #tpu.memory_space<vmem>>, vector<1x4x1xf32>,
    %c1_9 = arith.constant 1 : index
    %c0_10 = arith.constant 0 : index
    %c0_11 = arith.constant 0 : index
    %13 = vector.load %arg3[%c1_9, %c0_10, %c0_11] : memref<2x4x16xf32, #tpu.memory_space<vmem>>, vector<1x4x16xf32>
    %14 = vector.shape_cast %13 : vector<1x4x16xf32> to vector<4x16xf32>
    %c1_12 = arith.constant 1 : index
    %c0_13 = arith.constant 0 : index
    %c1_14 = arith.constant 1 : index
    %15 = vector.load %arg8[%c1_12, %c0_13, %c1_14] : memref<2x4x18xf32, #tpu.memory_space<vmem>>, vector<1x4x16xf32>
    %16 = vector.shape_cast %15 : vector<1x4x16xf32> to vector<4x16xf32>
    %17 = vector.shape_cast %14 : vector<4x16xf32> to vector<1x4x16xf32>
    tpu.vector_store %arg8[%c1_12, %c0_13, %c1_14], %17 {strides = array<i32>} : memref<2x4x18xf32, #tpu.memory_space<vmem>>, vector<1x4x16xf32>,
    %18 = vector.extract_strided_slice %14 {offsets = [0, 0], sizes = [4, 1], strides = [1, 1]} : vector<4x16xf32> to vector<4x1xf32>
    %c1_15 = arith.constant 1 : index
    %c0_16 = arith.constant 0 : index
    %c0_17 = arith.constant 0 : index
    %19 = vector.load %arg8[%c1_15, %c0_16, %c0_17] : memref<2x4x18xf32, #tpu.memory_space<vmem>>, vector<1x4x1xf32>
    %20 = vector.shape_cast %19 : vector<1x4x1xf32> to vector<4x1xf32>
    %21 = vector.shape_cast %18 : vector<4x1xf32> to vector<1x4x1xf32>
    tpu.vector_store %arg8[%c1_15, %c0_16, %c0_17], %21 {strides = array<i32>} : memref<2x4x18xf32, #tpu.memory_space<vmem>>, vector<1x4x1xf32>,
    %22 = vector.extract_strided_slice %14 {offsets = [0, 15], sizes = [4, 1], strides = [1, 1]} : vector<4x16xf32> to vector<4x1xf32>
    %c1_18 = arith.constant 1 : index
    %c0_19 = arith.constant 0 : index
    %c17_20 = arith.constant 17 : index
    %23 = vector.load %arg8[%c1_18, %c0_19, %c17_20] : memref<2x4x18xf32, #tpu.memory_space<vmem>>, vector<1x4x1xf32>
    %24 = vector.shape_cast %23 : vector<1x4x1xf32> to vector<4x1xf32>
    %25 = vector.shape_cast %22 : vector<4x1xf32> to vector<1x4x1xf32>
    tpu.vector_store %arg8[%c1_18, %c0_19, %c17_20], %25 {strides = array<i32>} : memref<2x4x18xf32, #tpu.memory_space<vmem>>, vector<1x4x1xf32>,
    %c0_21 = arith.constant 0 : index
    %c0_22 = arith.constant 0 : index
    %c0_23 = arith.constant 0 : index
    %26 = vector.load %arg8[%c0_21, %c0_22, %c0_23] : memref<2x4x18xf32, #tpu.memory_space<vmem>>, vector<1x4x16xf32>
    %27 = vector.shape_cast %26 : vector<1x4x16xf32> to vector<4x16xf32>
    %c0_24 = arith.constant 0 : index
    %c0_25 = arith.constant 0 : index
    %28 = vector.load %arg9[%c0_24, %c0_25] : memref<12x32xf32, #tpu.memory_space<vmem>>, vector<4x16xf32>
    tpu.vector_store %arg9[%c0_24, %c0_25], %27 {strides = array<i32>} : memref<12x32xf32, #tpu.memory_space<vmem>>, vector<4x16xf32>,
    %c0_26 = arith.constant 0 : index
    %c0_27 = arith.constant 0 : index
    %c1_28 = arith.constant 1 : index
    %29 = vector.load %arg8[%c0_26, %c0_27, %c1_28] : memref<2x4x18xf32, #tpu.memory_space<vmem>>, vector<1x4x16xf32>
    %30 = vector.shape_cast %29 : vector<1x4x16xf32> to vector<4x16xf32>
    %c4 = arith.constant 4 : index
    %c0_29 = arith.constant 0 : index
    %31 = vector.load %arg9[%c4, %c0_29] : memref<12x32xf32, #tpu.memory_space<vmem>>, vector<4x16xf32>
    tpu.vector_store %arg9[%c4, %c0_29], %30 {strides = array<i32>} : memref<12x32xf32, #tpu.memory_space<vmem>>, vector<4x16xf32>,
    %c0_30 = arith.constant 0 : index
    %c0_31 = arith.constant 0 : index
    %c2 = arith.constant 2 : index
    %32 = vector.load %arg8[%c0_30, %c0_31, %c2] : memref<2x4x18xf32, #tpu.memory_space<vmem>>, vector<1x4x16xf32>
    %33 = vector.shape_cast %32 : vector<1x4x16xf32> to vector<4x16xf32>
    %c8 = arith.constant 8 : index
    %c0_32 = arith.constant 0 : index
    %34 = vector.load %arg9[%c8, %c0_32] : memref<12x32xf32, #tpu.memory_space<vmem>>, vector<4x16xf32>
    tpu.vector_store %arg9[%c8, %c0_32], %33 {strides = array<i32>} : memref<12x32xf32, #tpu.memory_space<vmem>>, vector<4x16xf32>,
    %c1_33 = arith.constant 1 : index
    %c0_34 = arith.constant 0 : index
    %c0_35 = arith.constant 0 : index
    %35 = vector.load %arg8[%c1_33, %c0_34, %c0_35] : memref<2x4x18xf32, #tpu.memory_space<vmem>>, vector<1x4x16xf32>
    %36 = vector.shape_cast %35 : vector<1x4x16xf32> to vector<4x16xf32>
    %c0_36 = arith.constant 0 : index
    %c16 = arith.constant 16 : index
    %37 = vector.load %arg9[%c0_36, %c16] : memref<12x32xf32, #tpu.memory_space<vmem>>, vector<4x16xf32>
    tpu.vector_store %arg9[%c0_36, %c16], %36 {strides = array<i32>} : memref<12x32xf32, #tpu.memory_space<vmem>>, vector<4x16xf32>,
    %c1_37 = arith.constant 1 : index
    %c0_38 = arith.constant 0 : index
    %c1_39 = arith.constant 1 : index
    %38 = vector.load %arg8[%c1_37, %c0_38, %c1_39] : memref<2x4x18xf32, #tpu.memory_space<vmem>>, vector<1x4x16xf32>
    %39 = vector.shape_cast %38 : vector<1x4x16xf32> to vector<4x16xf32>
    %c4_40 = arith.constant 4 : index
    %c16_41 = arith.constant 16 : index
    %40 = vector.load %arg9[%c4_40, %c16_41] : memref<12x32xf32, #tpu.memory_space<vmem>>, vector<4x16xf32>
    tpu.vector_store %arg9[%c4_40, %c16_41], %39 {strides = array<i32>} : memref<12x32xf32, #tpu.memory_space<vmem>>, vector<4x16xf32>,
    %c1_42 = arith.constant 1 : index
    %c0_43 = arith.constant 0 : index
    %c2_44 = arith.constant 2 : index
    %41 = vector.load %arg8[%c1_42, %c0_43, %c2_44] : memref<2x4x18xf32, #tpu.memory_space<vmem>>, vector<1x4x16xf32>
    %42 = vector.shape_cast %41 : vector<1x4x16xf32> to vector<4x16xf32>
    %c8_45 = arith.constant 8 : index
    %c16_46 = arith.constant 16 : index
    %43 = vector.load %arg9[%c8_45, %c16_46] : memref<12x32xf32, #tpu.memory_space<vmem>>, vector<4x16xf32>
    tpu.vector_store %arg9[%c8_45, %c16_46], %42 {strides = array<i32>} : memref<12x32xf32, #tpu.memory_space<vmem>>, vector<4x16xf32>,
    %c0_47 = arith.constant 0 : index
    %c0_48 = arith.constant 0 : index
    %44 = vector.load %arg4[%c0_47, %c0_48] : memref<8x12xf32, #tpu.memory_space<vmem>>, vector<8x12xf32>
    %c0_49 = arith.constant 0 : index
    %c0_50 = arith.constant 0 : index
    %45 = vector.load %arg9[%c0_49, %c0_50] : memref<12x32xf32, #tpu.memory_space<vmem>>, vector<12x32xf32>
    %cst = arith.constant dense<0.000000e+00> : vector<8x32xf32>
    %46 = tpu.matmul %44, %45, %cst {dimension_numbers = #tpu.dot_dimension_numbers<[1], [0], [0], [1], [0, 0, 1, 1], [], []>} : vector<8x12xf32>, vector<12x32xf32>, vector<8x32xf32> -> vector<8x32xf32>
    %c0_i32 = arith.constant 0 : i32
    %47 = arith.cmpi eq, %arg1, %c0_i32 : i32
    %c0_i32_51 = arith.constant 0 : i32
    %48 = arith.cmpi eq, %arg2, %c0_i32_51 : i32
    %49 = arith.andi %47, %48 : i1
    %50 = arith.extui %49 : i1 to i32
    %c0_i32_52 = arith.constant 0 : i32
    %51 = arith.cmpi ne, %50, %c0_i32_52 : i32
    scf.if %51 {
      %cst_59 = arith.constant 0.000000e+00 : f32
      %63 = vector.broadcast %cst_59 : f32 to vector<8x1xf32>
      %c0_60 = arith.constant 0 : index
      %c0_61 = arith.constant 0 : index
      %64 = vector.load %arg10[%c0_60, %c0_61] : memref<8x1xf32, #tpu.memory_space<vmem>>, vector<8x1xf32>
      tpu.vector_store %arg10[%c0_60, %c0_61], %63 {strides = array<i32>} : memref<8x1xf32, #tpu.memory_space<vmem>>, vector<8x1xf32>,
      %cst_62 = arith.constant 0.000000e+00 : f32
      %65 = vector.broadcast %cst_62 : f32 to vector<8x1xf32>
      %c0_63 = arith.constant 0 : index
      %c0_64 = arith.constant 0 : index
      %66 = vector.load %arg11[%c0_63, %c0_64] : memref<8x1xf32, #tpu.memory_space<vmem>>, vector<8x1xf32>
      tpu.vector_store %arg11[%c0_63, %c0_64], %65 {strides = array<i32>} : memref<8x1xf32, #tpu.memory_space<vmem>>, vector<8x1xf32>,
      %cst_65 = arith.constant 0.000000e+00 : f32
      %67 = vector.broadcast %cst_65 : f32 to vector<2x8x16xf32>
      %c0_66 = arith.constant 0 : index
      %c0_67 = arith.constant 0 : index
      %c0_68 = arith.constant 0 : index
      %68 = vector.load %arg7[%c0_66, %c0_67, %c0_68] : memref<2x8x16xf32, #tpu.memory_space<vmem>>, vector<2x8x16xf32>
      tpu.vector_store %arg7[%c0_66, %c0_67, %c0_68], %67 {strides = array<i32>} : memref<2x8x16xf32, #tpu.memory_space<vmem>>, vector<2x8x16xf32>,
    } else {
    }
    %c0_i32_53 = arith.constant 0 : i32
    %52 = arith.cmpi eq, %arg1, %c0_i32_53 : i32
    %53 = arith.extui %52 : i1 to i32
    %c0_i32_54 = arith.constant 0 : i32
    %54 = arith.cmpi ne, %53, %c0_i32_54 : i32
    scf.if %54 {
      %c0_59 = arith.constant 0 : index
      %c0_60 = arith.constant 0 : index
      %63 = vector.load %arg10[%c0_59, %c0_60] : memref<8x1xf32, #tpu.memory_space<vmem>>, vector<8x1xf32>
      %cst_61 = arith.constant dense<0.000000e+00> : vector<8xf32>
      %64 = vector.multi_reduction <add>, %46, %cst_61 [1] : vector<8x32xf32> to vector<8xf32>
      %65 = vector.shape_cast %64 : vector<8xf32> to vector<8x1xf32>
      %66 = arith.addf %63, %65 : vector<8x1xf32>
      %c0_62 = arith.constant 0 : index
      %c0_63 = arith.constant 0 : index
      %67 = vector.load %arg10[%c0_62, %c0_63] : memref<8x1xf32, #tpu.memory_space<vmem>>, vector<8x1xf32>
      tpu.vector_store %arg10[%c0_62, %c0_63], %66 {strides = array<i32>} : memref<8x1xf32, #tpu.memory_space<vmem>>, vector<8x1xf32>,
      %c0_64 = arith.constant 0 : index
      %c0_65 = arith.constant 0 : index
      %68 = vector.load %arg11[%c0_64, %c0_65] : memref<8x1xf32, #tpu.memory_space<vmem>>, vector<8x1xf32>
      %69 = arith.mulf %46, %46 : vector<8x32xf32>
      %cst_66 = arith.constant dense<0.000000e+00> : vector<8xf32>
      %70 = vector.multi_reduction <add>, %69, %cst_66 [1] : vector<8x32xf32> to vector<8xf32>
      %71 = vector.shape_cast %70 : vector<8xf32> to vector<8x1xf32>
      %72 = arith.addf %68, %71 : vector<8x1xf32>
      %c0_67 = arith.constant 0 : index
      %c0_68 = arith.constant 0 : index
      %73 = vector.load %arg11[%c0_67, %c0_68] : memref<8x1xf32, #tpu.memory_space<vmem>>, vector<8x1xf32>
      tpu.vector_store %arg11[%c0_67, %c0_68], %72 {strides = array<i32>} : memref<8x1xf32, #tpu.memory_space<vmem>>, vector<8x1xf32>,
    } else {
    }
    %c1_i32 = arith.constant 1 : i32
    %55 = arith.cmpi eq, %arg1, %c1_i32 : i32
    %c0_i32_55 = arith.constant 0 : i32
    %56 = arith.cmpi eq, %arg2, %c0_i32_55 : i32
    %57 = arith.andi %55, %56 : i1
    %58 = arith.extui %57 : i1 to i32
    %c0_i32_56 = arith.constant 0 : i32
    %59 = arith.cmpi ne, %58, %c0_i32_56 : i32
    scf.if %59 {
      %c0_59 = arith.constant 0 : index
      %c0_60 = arith.constant 0 : index
      %63 = vector.load %arg10[%c0_59, %c0_60] : memref<8x1xf32, #tpu.memory_space<vmem>>, vector<8x1xf32>
      %cst_61 = arith.constant 3.125000e-02 : f32
      %64 = vector.broadcast %cst_61 : f32 to vector<8x1xf32>
      %65 = arith.mulf %63, %64 : vector<8x1xf32>
      %c0_62 = arith.constant 0 : index
      %c0_63 = arith.constant 0 : index
      %66 = vector.load %arg11[%c0_62, %c0_63] : memref<8x1xf32, #tpu.memory_space<vmem>>, vector<8x1xf32>
      %cst_64 = arith.constant 3.125000e-02 : f32
      %67 = vector.broadcast %cst_64 : f32 to vector<8x1xf32>
      %68 = arith.mulf %66, %67 : vector<8x1xf32>
      %69 = arith.mulf %65, %65 : vector<8x1xf32>
      %70 = arith.subf %68, %69 : vector<8x1xf32>
      %cst_65 = arith.constant 0.000000e+00 : f32
      %71 = vector.broadcast %cst_65 : f32 to vector<8x1xf32>
      %72 = arith.maximumf %70, %71 : vector<8x1xf32>
      %c0_66 = arith.constant 0 : index
      %c0_67 = arith.constant 0 : index
      %73 = vector.load %arg5[%c0_66, %c0_67] : memref<8x1xf32, #tpu.memory_space<vmem>>, vector<8x1xf32>
      %cst_68 = arith.constant 9.99999974E-6 : f32
      %74 = vector.broadcast %cst_68 : f32 to vector<8x1xf32>
      %75 = arith.addf %72, %74 : vector<8x1xf32>
      %76 = math.rsqrt %75 : vector<8x1xf32>
      %77 = arith.mulf %73, %76 : vector<8x1xf32>
      %c0_69 = arith.constant 0 : index
      %c0_70 = arith.constant 0 : index
      %78 = vector.load %arg12[%c0_69, %c0_70] : memref<8x1xf32, #tpu.memory_space<vmem>>, vector<8x1xf32>
      tpu.vector_store %arg12[%c0_69, %c0_70], %77 {strides = array<i32>} : memref<8x1xf32, #tpu.memory_space<vmem>>, vector<8x1xf32>,
      %c0_71 = arith.constant 0 : index
      %c0_72 = arith.constant 0 : index
      %79 = vector.load %arg6[%c0_71, %c0_72] : memref<8x1xf32, #tpu.memory_space<vmem>>, vector<8x1xf32>
      %80 = arith.mulf %65, %77 : vector<8x1xf32>
      %81 = arith.subf %79, %80 : vector<8x1xf32>
      %c0_73 = arith.constant 0 : index
      %c0_74 = arith.constant 0 : index
      %82 = vector.load %arg13[%c0_73, %c0_74] : memref<8x1xf32, #tpu.memory_space<vmem>>, vector<8x1xf32>
      tpu.vector_store %arg13[%c0_73, %c0_74], %81 {strides = array<i32>} : memref<8x1xf32, #tpu.memory_space<vmem>>, vector<8x1xf32>,
    } else {
    }
    %c1_i32_57 = arith.constant 1 : i32
    %60 = arith.cmpi eq, %arg1, %c1_i32_57 : i32
    %61 = arith.extui %60 : i1 to i32
    %c0_i32_58 = arith.constant 0 : i32
    %62 = arith.cmpi ne, %61, %c0_i32_58 : i32
    scf.if %62 {
      %c0_59 = arith.constant 0 : index
      %c0_60 = arith.constant 0 : index
      %63 = vector.load %arg12[%c0_59, %c0_60] : memref<8x1xf32, #tpu.memory_space<vmem>>, vector<8x1xf32>
      %64 = vector.broadcast %63 : vector<8x1xf32> to vector<8x32xf32>
      %65 = arith.mulf %46, %64 : vector<8x32xf32>
      %c0_61 = arith.constant 0 : index
      %c0_62 = arith.constant 0 : index
      %66 = vector.load %arg13[%c0_61, %c0_62] : memref<8x1xf32, #tpu.memory_space<vmem>>, vector<8x1xf32>
      %67 = vector.broadcast %66 : vector<8x1xf32> to vector<8x32xf32>
      %68 = arith.addf %65, %67 : vector<8x32xf32>
      %cst_63 = arith.constant 0.000000e+00 : f32
      %69 = vector.broadcast %cst_63 : f32 to vector<8x32xf32>
      %70 = arith.maximumf %68, %69 : vector<8x32xf32>
      %71 = vector.extract_strided_slice %70 {offsets = [0, 0], sizes = [8, 16], strides = [1, 1]} : vector<8x32xf32> to vector<8x16xf32>
      %c0_64 = arith.constant 0 : index
      %c0_65 = arith.constant 0 : index
      %c0_66 = arith.constant 0 : index
      %72 = vector.load %arg7[%c0_64, %c0_65, %c0_66] : memref<2x8x16xf32, #tpu.memory_space<vmem>>, vector<1x8x16xf32>
      %73 = vector.shape_cast %72 : vector<1x8x16xf32> to vector<8x16xf32>
      %74 = vector.shape_cast %71 : vector<8x16xf32> to vector<1x8x16xf32>
      tpu.vector_store %arg7[%c0_64, %c0_65, %c0_66], %74 {strides = array<i32>} : memref<2x8x16xf32, #tpu.memory_space<vmem>>, vector<1x8x16xf32>,
      %75 = vector.extract_strided_slice %70 {offsets = [0, 16], sizes = [8, 16], strides = [1, 1]} : vector<8x32xf32> to vector<8x16xf32>
      %c1_67 = arith.constant 1 : index
      %c0_68 = arith.constant 0 : index
      %c0_69 = arith.constant 0 : index
      %76 = vector.load %arg7[%c1_67, %c0_68, %c0_69] : memref<2x8x16xf32, #tpu.memory_space<vmem>>, vector<1x8x16xf32>
      %77 = vector.shape_cast %76 : vector<1x8x16xf32> to vector<8x16xf32>
      %78 = vector.shape_cast %75 : vector<8x16xf32> to vector<1x8x16xf32>
      tpu.vector_store %arg7[%c1_67, %c0_68, %c0_69], %78 {strides = array<i32>} : memref<2x8x16xf32, #tpu.memory_space<vmem>>, vector<1x8x16xf32>,
    } else {
    }
    return
  }
  func.func @transform_0(%arg0: i32, %arg1: i32, %arg2: i32) -> (i32, i32, i32) {
    %c0_i32 = arith.constant 0 : i32
    %c0_i32_0 = arith.constant 0 : i32
    %c0_i32_1 = arith.constant 0 : i32
    return %arg2, %c0_i32, %c0_i32_0 : i32, i32, i32
  }
  func.func @transform_1(%arg0: i32, %arg1: i32, %arg2: i32) -> (i32, i32) {
    %c0_i32 = arith.constant 0 : i32
    %c0_i32_0 = arith.constant 0 : i32
    return %arg0, %c0_i32 : i32, i32
  }
  func.func @transform_2(%arg0: i32, %arg1: i32, %arg2: i32) -> (i32, i32) {
    %c0_i32 = arith.constant 0 : i32
    %c0_i32_0 = arith.constant 0 : i32
    return %arg0, %c0_i32 : i32, i32
  }
  func.func @transform_3(%arg0: i32, %arg1: i32, %arg2: i32) -> (i32, i32) {
    %c0_i32 = arith.constant 0 : i32
    %c0_i32_0 = arith.constant 0 : i32
    return %arg0, %c0_i32 : i32, i32
  }
  func.func @transform_4(%arg0: i32, %arg1: i32, %arg2: i32) -> (i32, i32, i32) {
    %0 = arith.muli %arg2, %arg1 : i32
    %c0_i32 = arith.constant 0 : i32
    %c0_i32_0 = arith.constant 0 : i32
    return %0, %arg0, %c0_i32 : i32, i32, i32
  }
}

</mosaic_0001>

<llo_original>
// kernel: tpu_custom_call.1
$region0: #{tpu_custom_call.1}
  #allocation0 [shape = 'u32[]', space=smem, size = 0x4, offset = 0x4, fixed_abs, tag = 'smem constant byte address 0x4 - core index']
  #allocation1 [shape = 'u32[144,128]{1,0:T(1,128)}', space=vmem, size = 0x12000, scoped, tag = 'internal scratch']
  #allocation2 [shape = 'f32[2,4,18]{2,1,0:T(4,128)}', space=vmem, size = 0x1000, scoped, tag = 'scratch operand']
  #allocation3 [shape = 'f32[12,32]{1,0:T(8,128)}', space=vmem, size = 0x2000, scoped, tag = 'scratch operand']
  #allocation4 [shape = 'f32[8,1]{1,0:T(8,128)}', space=vmem, size = 0x1000, scoped, tag = 'scratch operand']
  #allocation5 [shape = 'f32[8,1]{1,0:T(8,128)}', space=vmem, size = 0x1000, scoped, tag = 'scratch operand']
  #allocation6 [shape = 'f32[8,1]{1,0:T(8,128)}', space=vmem, size = 0x1000, scoped, tag = 'scratch operand']
  #allocation7 [shape = 'f32[8,1]{1,0:T(8,128)}', space=vmem, size = 0x1000, scoped, tag = 'scratch operand']
  %s0 = inlined_call_operand.vmem [shape: f32[2,4,16], index: 0, kind: input, shape index: {}]
  %s1 = inlined_call_operand.vmem [shape: f32[8,12], index: 1, kind: input, shape index: {}]
  %s2 = inlined_call_operand.vmem [shape: f32[8,1], index: 2, kind: input, shape index: {}]
  %s3 = inlined_call_operand.vmem [shape: f32[8,1], index: 3, kind: input, shape index: {}]
  %s4 = inlined_call_operand.hbm [shape: f32[2,8,16], index: 4, kind: output, shape index: {}]
  %s5 = sld [smem:[#allocation0]]
  $region65: #{tpu_custom_call.1} parent=0
    _
  %s7 = ssub.s32 1, %s5
  %s8 = scalar_select 0, %s7, %s5
  $region1: #{tpu_custom_call.1} parent=0
    #allocation8 [shape = 'u8[16384]{0}', space=vmem, size = 0x4000, scoped, tag = 'output window, operand 0']
    #allocation9 [shape = 's32[2]{0}', space=sflag, size = 0x8, scoped, tag = 'scoped memory for tpu_custom_call.1']
    %9 = vsyncpa [#allocation9], 0
    %s10 = scalar_lea.sflag [#allocation9], 1
    %11 = vsyncpa %s10, 0
    loop: start=0, step=1, limit=4
    $region2: #{tpu_custom_call.1} parent=1 // loop_pre_header
      _
    $region3: #{tpu_custom_call.1} parent=1 // loop_header
      %s13 = sphi 0, %s17
      %p14 = scmp.ge.s32.totalorder %s13, 4
      %s20 = sphi 0, %s39
      %s21 = sphi 0, %s35
      %s22 = sphi 0, %s31
      %s23 = sphi 0, %s20
      %s24 = sphi 0, %s21
      %s25 = sphi 0, %s22
      %s26 = sphi 0, %s23
      %s27 = sphi 0, %s24
      %s28 = sphi 0, %s25
      %s42 = sphi 0, %s44
      %s45 = sphi 0, %s42
      %s46 = sphi 0, %s45
      %s62 = sphi 0, %s46
      %s68 = sphi 0, %s70
      %s71 = sphi 0, %s68
      %s72 = sphi 0, %s71
      %s88 = sphi 0, %s72
      %s94 = sphi 0, %s96
      %s97 = sphi 0, %s94
      %s98 = sphi 0, %s97
      %s114 = sphi 0, %s98
      %s120 = sphi 0, %s122
      %s123 = sphi 0, %s120
      %s124 = sphi 0, %s123
      %s140 = sphi 0, %s124
      %s150 = sphi 0, %s152
      %s153 = sphi 0, %s150
      %s154 = sphi 0, %s153
      %s170 = sphi 0, %s154
    $region4: #{tpu_custom_call.1} parent=1 // loop_header_branch
      %16 = sbr.rel (%p14) target = $region8
    $region5: #{tpu_custom_call.1} parent=1 // loop_body
      %s18 = ssub.s32 %s13, 1
      %s19 = ssub.s32 %s13, 2
      %s29 = sadd.s32 1, %s22
      %p30 = scmp.ge.s32.totalorder %s29, 1
      %s31 = scalar_select %p30, 0, %s29
      %s32 = sadd.s32 1, %s21
      %s33 = scalar_select %p30, %s32, %s21
      %p34 = scmp.ge.s32.totalorder %s33, 2
      %s35 = scalar_select %p34, 0, %s33
      %s36 = sadd.s32 1, %s20
      %s37 = scalar_select %p34, %s36, %s20
      %p38 = scmp.ge.s32.totalorder %s37, 1
      %s39 = scalar_select %p38, 0, %s37
      %s40 = ssub.s32 %s22, %s31
      %p41 = scmp.eq.s32.totalorder %s40, 0
      %s43 = sadd.s32 %s42, 1
      %s44 = scalar_select %p41, %s42, %s43
      %p47 = pneg %p41
      %p48 = scmp.eq.s32.totalorder %s13, 1
      %p49 = por %p47, %p48
      %p50 = scmp.ne.s32.totalorder %s42, %s45
      %p51 = scmp.eq.s32.totalorder %s13, 0
      %p52 = por %p50, %p51
      %p53 = scmp.ne.s32.totalorder %s42, %s45
      %p54 = scmp.eq.s32.totalorder %s18, 1
      %p55 = por %p53, %p54
      %p56 = scmp.ne.s32.totalorder %s45, %s46
      %p57 = scmp.eq.s32.totalorder %s18, 0
      %p58 = por %p56, %p57
      %p59 = scmp.ne.s32.totalorder %s45, %s46
      %p60 = scmp.eq.s32.totalorder %s19, 1
      %p61 = por %p59, %p60
      %p63 = scmp.ne.s32.totalorder %s46, %s62
      %p64 = scmp.eq.s32.totalorder %s19, 0
      %p65 = por %p63, %p64
      %s66 = ssub.s32 %s20, %s39
      %p67 = scmp.eq.s32.totalorder %s66, 0
      %s69 = sadd.s32 %s68, 1
      %s70 = scalar_select %p67, %s68, %s69
      %p73 = pneg %p67
      %p74 = scmp.eq.s32.totalorder %s13, 1
      %p75 = por %p73, %p74
      %p76 = scmp.ne.s32.totalorder %s68, %s71
      %p77 = scmp.eq.s32.totalorder %s13, 0
      %p78 = por %p76, %p77
      %p79 = scmp.ne.s32.totalorder %s68, %s71
      %p80 = scmp.eq.s32.totalorder %s18, 1
      %p81 = por %p79, %p80
      %p82 = scmp.ne.s32.totalorder %s71, %s72
      %p83 = scmp.eq.s32.totalorder %s18, 0
      %p84 = por %p82, %p83
      %p85 = scmp.ne.s32.totalorder %s71, %s72
      %p86 = scmp.eq.s32.totalorder %s19, 1
      %p87 = por %p85, %p86
      %p89 = scmp.ne.s32.totalorder %s72, %s88
      %p90 = scmp.eq.s32.totalorder %s19, 0
      %p91 = por %p89, %p90
      %s92 = ssub.s32 %s20, %s39
      %p93 = scmp.eq.s32.totalorder %s92, 0
      %s95 = sadd.s32 %s94, 1
      %s96 = scalar_select %p93, %s94, %s95
      %p99 = pneg %p93
      %p100 = scmp.eq.s32.totalorder %s13, 1
      %p101 = por %p99, %p100
      %p102 = scmp.ne.s32.totalorder %s94, %s97
      %p103 = scmp.eq.s32.totalorder %s13, 0
      %p104 = por %p102, %p103
      %p105 = scmp.ne.s32.totalorder %s94, %s97
      %p106 = scmp.eq.s32.totalorder %s18, 1
      %p107 = por %p105, %p106
      %p108 = scmp.ne.s32.totalorder %s97, %s98
      %p109 = scmp.eq.s32.totalorder %s18, 0
      %p110 = por %p108, %p109
      %p111 = scmp.ne.s32.totalorder %s97, %s98
      %p112 = scmp.eq.s32.totalorder %s19, 1
      %p113 = por %p111, %p112
      %p115 = scmp.ne.s32.totalorder %s98, %s114
      %p116 = scmp.eq.s32.totalorder %s19, 0
      %p117 = por %p115, %p116
      %s118 = ssub.s32 %s20, %s39
      %p119 = scmp.eq.s32.totalorder %s118, 0
      %s121 = sadd.s32 %s120, 1
      %s122 = scalar_select %p119, %s120, %s121
      %p125 = pneg %p119
      %p126 = scmp.eq.s32.totalorder %s13, 1
      %p127 = por %p125, %p126
      %p128 = scmp.ne.s32.totalorder %s120, %s123
      %p129 = scmp.eq.s32.totalorder %s13, 0
      %p130 = por %p128, %p129
      %p131 = scmp.ne.s32.totalorder %s120, %s123
      %p132 = scmp.eq.s32.totalorder %s18, 1
      %p133 = por %p131, %p132
      %p134 = scmp.ne.s32.totalorder %s123, %s124
      %p135 = scmp.eq.s32.totalorder %s18, 0
      %p136 = por %p134, %p135
      %p137 = scmp.ne.s32.totalorder %s123, %s124
      %p138 = scmp.eq.s32.totalorder %s19, 1
      %p139 = por %p137, %p138
      %p141 = scmp.ne.s32.totalorder %s124, %s140
      %p142 = scmp.eq.s32.totalorder %s19, 0
      %p143 = por %p141, %p142
      %s144 = smul.u32 %s22, %s21
      %s145 = smul.u32 %s31, %s35
      %s146 = ssub.s32 %s144, %s145
      %s147 = ssub.s32 %s20, %s39
      %s148 = sor.u32 %s146, %s147
      %p149 = scmp.eq.s32.totalorder %s148, 0
      %s151 = sadd.s32 %s150, 1
      %s152 = scalar_select %p149, %s150, %s151
      %p155 = pneg %p149
      %p156 = scmp.eq.s32.totalorder %s13, 1
      %p157 = por %p155, %p156
      %p158 = scmp.ne.s32.totalorder %s150, %s153
      %p159 = scmp.eq.s32.totalorder %s13, 0
      %p160 = por %p158, %p159
      %p161 = scmp.ne.s32.totalorder %s150, %s153
      %p162 = scmp.eq.s32.totalorder %s18, 1
      %p163 = por %p161, %p162
      %p164 = scmp.ne.s32.totalorder %s153, %s154
      %p165 = scmp.eq.s32.totalorder %s18, 0
      %p166 = por %p164, %p165
      %p167 = scmp.ne.s32.totalorder %s153, %s154
      %p168 = scmp.eq.s32.totalorder %s19, 1
      %p169 = por %p167, %p168
      %p171 = scmp.ne.s32.totalorder %s154, %s170
      %p172 = scmp.eq.s32.totalorder %s19, 0
      %p173 = por %p171, %p172
      %p174 = scmp.le.s32.totalorder 1, %s13
      %p175 = scmp.lt.s32.totalorder %s13, 3
      %p176 = pnand %p174, %p175
      %p177 = pneg %p176
      // Predicated region
      $region9: #{tpu_custom_call.1} parent=5 // pred_check
        _
      $region10: #{tpu_custom_call.1} parent=5 // pred_check_branch
        %179 = sbr.rel (%p176) target = $region12
      $region11: #{tpu_custom_call.1} parent=5 // pred_region
        %s180 = ssub.s32 %s13, 1
        // Predicated region
        $region13: #{tpu_custom_call.1} parent=11 // pred_check
          %p181 = pneg %p58
        $region14: #{tpu_custom_call.1} parent=11 // pred_check_branch
          %183 = sbr.rel (%p181) target = $region16
        $region15: #{tpu_custom_call.1} parent=11 // pred_region
          %s184 = smul.u32 2, %s25
          %p185 = scmp.lt.s32.totalorder %s184, 1
          %s186 = scalar_select %p185, %s184, 1
          %s187 = smul.addr %s186, 4
          %s188 = scalar_lea.vmem %s0, %s187
          %s189 = smul.u32 2, %s25
        $region16: #{tpu_custom_call.1} parent=11 // pred_fallthru
          _
        // Predicated region
        $region17: #{tpu_custom_call.1} parent=11 // pred_check
          %p190 = pneg %p84
        $region18: #{tpu_custom_call.1} parent=11 // pred_check_branch
          %192 = sbr.rel (%p190) target = $region20
        $region19: #{tpu_custom_call.1} parent=11 // pred_region
          %p193 = scmp.lt.s32.totalorder %s23, 0
          %s194 = scalar_select %p193, %s23, 0
          %s195 = smul.addr %s194, 8
          %s196 = scalar_lea.vmem %s1, %s195
        $region20: #{tpu_custom_call.1} parent=11 // pred_fallthru
          _
        // Predicated region
        $region21: #{tpu_custom_call.1} parent=11 // pred_check
          %p197 = pneg %p110
        $region22: #{tpu_custom_call.1} parent=11 // pred_check_branch
          %199 = sbr.rel (%p197) target = $region24
        $region23: #{tpu_custom_call.1} parent=11 // pred_region
          %p200 = scmp.lt.s32.totalorder %s23, 0
          %s201 = scalar_select %p200, %s23, 0
          %s202 = smul.addr %s201, 8
          %s203 = scalar_lea.vmem %s2, %s202
        $region24: #{tpu_custom_call.1} parent=11 // pred_fallthru
          _
        // Predicated region
        $region25: #{tpu_custom_call.1} parent=11 // pred_check
          %p204 = pneg %p136
        $region26: #{tpu_custom_call.1} parent=11 // pred_check_branch
          %206 = sbr.rel (%p204) target = $region28
        $region27: #{tpu_custom_call.1} parent=11 // pred_region
          %p207 = scmp.lt.s32.totalorder %s23, 0
          %s208 = scalar_select %p207, %s23, 0
          %s209 = smul.addr %s208, 8
          %s210 = scalar_lea.vmem %s3, %s209
        $region28: #{tpu_custom_call.1} parent=11 // pred_fallthru
          _
      $region12: #{tpu_custom_call.1} parent=5 // pred_fallthru
        _
      %p211 = scmp.lt.s32.totalorder %s13, 2
      // Predicated region
      $region29: #{tpu_custom_call.1} parent=5 // pred_check
        %p212 = pneg %p211
      $region30: #{tpu_custom_call.1} parent=5 // pred_check_branch
        %214 = sbr.rel (%p212) target = $region32
      $region31: #{tpu_custom_call.1} parent=5 // pred_region
        _
      $region32: #{tpu_custom_call.1} parent=5 // pred_fallthru
        _
      %p215 = scmp.le.s32.totalorder 1, %s13
      %p216 = scmp.lt.s32.totalorder %s13, 3
      %p217 = pnand %p215, %p216
      %p218 = pneg %p217
      // Predicated region
      $region33: #{tpu_custom_call.1} parent=5 // pred_check
        _
      $region34: #{tpu_custom_call.1} parent=5 // pred_check_branch
        %220 = sbr.rel (%p217) target = $region36
      $region35: #{tpu_custom_call.1} parent=5 // pred_region
        %s221 = ssub.s32 %s13, 1
        %s222 = smul.u32 2, %s25
        %p223 = scmp.lt.s32.totalorder %s222, 1
        %s224 = scalar_select %p223, %s222, 1
        %s225 = smul.addr %s224, 4
        %s226 = scalar_lea.vmem %s0, %s225
        %p227 = pneg %p58
        %p228 = pneg %p55
        %p229 = scmp.lt.s32.totalorder %s23, 0
        %s230 = scalar_select %p229, %s23, 0
        %s231 = smul.addr %s230, 8
        %s232 = scalar_lea.vmem %s1, %s231
        %p233 = pneg %p84
        %p234 = pneg %p81
        %p235 = scmp.lt.s32.totalorder %s23, 0
        %s236 = scalar_select %p235, %s23, 0
        %s237 = smul.addr %s236, 8
        %s238 = scalar_lea.vmem %s2, %s237
        %p239 = pneg %p110
        %p240 = pneg %p107
        %p241 = scmp.lt.s32.totalorder %s23, 0
        %s242 = scalar_select %p241, %s23, 0
        %s243 = smul.addr %s242, 8
        %s244 = scalar_lea.vmem %s3, %s243
        %p245 = pneg %p136
        %p246 = pneg %p133
        %p247 = pneg %p166
        %p248 = pneg %p163
        %s249 = sand.u32 %s153, 1
        %s250 = scalar_lea.sflag [#allocation9], %s249
        %s251 = sand.u32 %s153, 1
        %s252 = smul.addr %s251, 16
        %s253 = scalar_lea.vmem [#allocation8], %s252
        %s254 = smul.u32 2, %s25
        %p255 = scmp.lt.s32.totalorder %s254, 1
        %s256 = scalar_select %p255, %s254, 1
        %s257 = smul.addr %s256, 4
        %s258 = scalar_lea.vmem %s0, %s257
        %s259 = smul.u32 2, %s25
        %p260 = scmp.lt.s32.totalorder %s23, 0
        %s261 = scalar_select %p260, %s23, 0
        %s262 = smul.addr %s261, 8
        %s263 = scalar_lea.vmem %s1, %s262
        %p264 = scmp.lt.s32.totalorder %s23, 0
        %s265 = scalar_select %p264, %s23, 0
        %s266 = smul.addr %s265, 8
        %s267 = scalar_lea.vmem %s2, %s266
        %p268 = scmp.lt.s32.totalorder %s23, 0
        %s269 = scalar_select %p268, %s23, 0
        %s270 = smul.addr %s269, 8
        %s271 = scalar_lea.vmem %s3, %s270
        %s272 = smul.u32 %s25, %s24
        %s273 = smul.u32 2, %s272
        %v274 = vld [vmem:[%s258] sm:$0xf]
        %276 = vrot.lane.b32.xlu0 %v274, 1
        %v277 = vpop.permute.xlu0 %276
        %vm279 = vcmask 134152
        %280 = vst.msk [vmem:[#allocation2] sm:$0xf] %vm279, %v277
        %vm281 = vcmask 3072
        %282 = vst.msk [vmem:[#allocation2] sm:$0xf] %vm281, %v274
        %283 = vrot.lane.b32.xlu0 %v274, 2
        %v284 = vpop.permute.xlu0 %283
        %vm286 = vcmask 142472
        %287 = vst.msk [vmem:[#allocation2] sm:$0xf] %vm286, %v284
        %s288 = scalar_lea.vmem %s258, 4
        %v289 = vld [vmem:[%s288] sm:$0xf]
        %291 = vrot.lane.b32.xlu0 %v289, 1
        %v292 = vpop.permute.xlu0 %291
        %s294 = scalar_lea.vmem [#allocation2], 4
        %295 = vst.msk [vmem:[%s294] sm:$0xf] %vm279, %v292
        %296 = vst.msk [vmem:[%s294] sm:$0xf] %vm281, %v289
        %297 = vrot.lane.b32.xlu0 %v289, 2
        %v298 = vpop.permute.xlu0 %297
        %300 = vst.msk [vmem:[%s294] sm:$0xf] %vm286, %v298
        %v301 = vld [vmem:[#allocation2] sm:$0xf]
        %vm302 = vcmask 125952
        %303 = vst.msk [vmem:[#allocation3] sm:$0xf] %vm302, %v301
        %v304 = vld [vmem:[#allocation2] sm:$0xf]
        %306 = vrot.lane.b32.xlu0 %v304, 127
        %v307 = vpop.permute.xlu0 %306
        %309 = vst.msk [vmem:[#allocation3 + $0x4] sm:$0xf] %vm302, %v307
        %v310 = vld [vmem:[#allocation2] sm:$0xf]
        %312 = vrot.lane.b32.xlu0 %v310, 126
        %v313 = vpop.permute.xlu0 %312
        %315 = vst.msk [vmem:[#allocation3 + $0x8] sm:$0xf] %vm302, %v313
        %v316 = vld [vmem:[%s294] sm:$0xf]
        %318 = vrot.lane.b32.xlu0 %v316, 16
        %v319 = vpop.permute.xlu0 %318
        %vm321 = vcmask 257152
        %322 = vst.msk [vmem:[#allocation3] sm:$0xf] %vm321, %v319
        %v323 = vld [vmem:[%s294] sm:$0xf]
        %325 = vrot.lane.b32.xlu0 %v323, 15
        %v326 = vpop.permute.xlu0 %325
        %328 = vst.msk [vmem:[#allocation3 + $0x4] sm:$0xf] %vm321, %v326
        %v329 = vld [vmem:[%s294] sm:$0xf]
        %331 = vrot.lane.b32.xlu0 %v329, 14
        %v332 = vpop.permute.xlu0 %331
        %334 = vst.msk [vmem:[#allocation3 + $0x8] sm:$0xf] %vm321, %v332
        %v335 = vld [vmem:[%s263] sm:$0xff]
        %v336 = vld [vmem:[#allocation3] sm:$0xff]
        %v337 = vld [vmem:[#allocation3 + $0x8] sm:$0xf]
        %vm338 = vcmask 97280
        %v340 = vsel %vm338, %v335, 0
        %vm342 = vcmask 1043456
        %v344 = vsel %vm342, %v337, 0
        %346 = vmatprep.subr.mxu0 0.0
        %347 = vmatpush1.msra.mxu0 0.0
        %348 = vmatprep.subr.mxu0 0.0
        %349 = vmatpush1.msra.mxu0 0.0
        %350 = vmatprep.subr.mxu0 0.0
        %351 = vmatpush1.msra.mxu0 0.0
        %352 = vmatprep.subr.mxu0 0.0
        %353 = vmatpush1.msra.mxu0 0.0
        %354 = vmatprep.subr.mxu0 0.0
        %355 = vmatpush1.msra.mxu0 0.0
        %356 = vmatprep.subr.mxu0 0.0
        %357 = vmatpush1.msra.mxu0 0.0
        %358 = vmatprep.subr.mxu0 0.0
        %359 = vmatpush1.msra.mxu0 0.0
        %360 = vmatprep.subr.mxu0 0.0
        %361 = vmatpush1.msra.mxu0 0.0
        %362 = vmatprep.subr.mxu0 0.0
        %363 = vmatpush1.msra.mxu0 0.0
        %364 = vmatprep.subr.mxu0 0.0
        %365 = vmatpush1.msra.mxu0 0.0
        %366 = vmatprep.subr.mxu0 0.0
        %367 = vmatpush1.msra.mxu0 0.0
        %368 = vmatprep.subr.mxu0 0.0
        %369 = vmatpush1.msra.mxu0 0.0
        %370 = vmatprep.subr.mxu0 0.0
        %371 = vmatpush1.msra.mxu0 0.0
        %372 = vmatprep.subr.mxu0 0.0
        %373 = vmatpush1.msra.mxu0 0.0
        %374 = vmatprep.subr.mxu0 0.0
        %375 = vmatpush1.msra.mxu0 %v344
        %376 = vmatprep.subr.mxu0 0.0
        %377 = vmatpush1.msra.mxu0 %v336
        %378 = vmatprep.subr.mxu0 0.0
        %379 = vmatpush2.msra.mxu0 0.0
        %380 = vmatprep.subr.mxu0 0.0
        %381 = vmatpush2.msra.mxu0 0.0
        %382 = vmatprep.subr.mxu0 0.0
        %383 = vmatpush2.msra.mxu0 0.0
        %384 = vmatprep.subr.mxu0 0.0
        %385 = vmatpush2.msra.mxu0 0.0
        %386 = vmatprep.subr.mxu0 0.0
        %387 = vmatpush2.msra.mxu0 0.0
        %388 = vmatprep.subr.mxu0 0.0
        %389 = vmatpush2.msra.mxu0 0.0
        %390 = vmatprep.subr.mxu0 0.0
        %391 = vmatpush2.msra.mxu0 0.0
        %392 = vmatprep.subr.mxu0 0.0
        %393 = vmatpush2.msra.mxu0 0.0
        %394 = vmatprep.subr.mxu0 0.0
        %395 = vmatpush2.msra.mxu0 0.0
        %396 = vmatprep.subr.mxu0 0.0
        %397 = vmatpush2.msra.mxu0 0.0
        %398 = vmatprep.subr.mxu0 0.0
        %399 = vmatpush2.msra.mxu0 0.0
        %400 = vmatprep.subr.mxu0 0.0
        %401 = vmatpush2.msra.mxu0 0.0
        %402 = vmatprep.subr.mxu0 0.0
        %403 = vmatpush2.msra.mxu0 0.0
        %404 = vmatprep.subr.mxu0 0.0
        %405 = vmatpush2.msra.mxu0 0.0
        %406 = vmatprep.subr.mxu0 0.0
        %407 = vmatpush2.msra.mxu0 0.0
        %408 = vmatprep.subr.mxu0 0.0
        %409 = vmatpush2.msra.mxu0 0.0
        %410 = vmatprep.mubr.f32.mxu0 0.0
        %411 = vmatmul.mubr.f32.gmra.mxu0 %v340
        %v412 = vpop.f32.mrf.mxu0
        %v413 = vadd.f32 0.0, %v412
        %v414 = vpop.f32.mrf.mxu0
        %415 = vdwg.mxu0
        %p416 = scmp.eq.s32.totalorder %s24, 0
        %p417 = scmp.eq.s32.totalorder %s25, 0
        %p418 = pnand %p416, %p417
        %p419 = pneg %p418
        // Predicated region
        $region37: #{tpu_custom_call.1} parent=35 // pred_check
          _
        $region38: #{tpu_custom_call.1} parent=35 // pred_check_branch
          %421 = sbr.rel (%p418) target = $region40
        $region39: #{tpu_custom_call.1} parent=35 // pred_region
          %vm422 = vcmask 7168
          %423 = vst.msk [vmem:[#allocation4] sm:$0xff] %vm422, 0.0
          %424 = vst.msk [vmem:[#allocation5] sm:$0xff] %vm422, 0.0
          %vm425 = vcmask 130048
          %426 = vst.msk [vmem:[%s253] sm:$0xff] %vm425, 0.0
          %427 = vst.msk [vmem:[%s253 + $0x8] sm:$0xff] %vm425, 0.0
        $region40: #{tpu_custom_call.1} parent=35 // pred_fallthru
          _
        // Predicated region
        $region41: #{tpu_custom_call.1} parent=35 // pred_check
          %p428 = pneg %p416
        $region42: #{tpu_custom_call.1} parent=35 // pred_check_branch
          %430 = sbr.rel (%p428) target = $region44
        $region43: #{tpu_custom_call.1} parent=35 // pred_region
          %v431 = vld [vmem:[#allocation4] sm:$0xff]
          %vm432 = vcmask 261120
          %v433 = vsel %vm432, %v413, 0.0
          %434 = vadd.xlane.f32.xlu0 %v433
          %v435 = vpop.xlane.xlu0 %434
          %v436 = vadd.f32 %v431, %v435
          %vm437 = vcmask 7168
          %438 = vst.msk [vmem:[#allocation4] sm:$0xff] %vm437, %v436
          %v439 = vld [vmem:[#allocation5] sm:$0xff]
          %v440 = vmul.f32 %v413, %v413
          %v441 = vsel %vm432, %v440, 0.0
          %442 = vadd.xlane.f32.xlu0 %v441
          %v443 = vpop.xlane.xlu0 %442
          %v444 = vadd.f32 %v439, %v443
          %445 = vst.msk [vmem:[#allocation5] sm:$0xff] %vm437, %v444
        $region44: #{tpu_custom_call.1} parent=35 // pred_fallthru
          _
        %p446 = scmp.eq.s32.totalorder %s24, 1
        %p447 = pnand %p446, %p417
        %p448 = pneg %p447
        // Predicated region
        $region45: #{tpu_custom_call.1} parent=35 // pred_check
          _
        $region46: #{tpu_custom_call.1} parent=35 // pred_check_branch
          %450 = sbr.rel (%p447) target = $region48
        $region47: #{tpu_custom_call.1} parent=35 // pred_region
          %v451 = vld [vmem:[#allocation4] sm:$0xff]
          %v452 = vmul.f32 %v451, 0.03125
          %v453 = vld [vmem:[#allocation5] sm:$0xff]
          %v454 = vmul.f32 %v453, 0.03125
          %v455 = vmul.f32 %v452, %v452
          %v456 = vsub.f32 %v454, %v455
          %v457 = vmax.f32 %v456, 0.0
          %v458 = vld [vmem:[%s267] sm:$0xff]
          %v459 = vadd.f32 %v457, 1e-05
          %v460 = vrsqrt.pop %v459
          %v461 = vmul.f32 %v458, %v460
          %vm462 = vcmask 7168
          %463 = vst.msk [vmem:[#allocation6] sm:$0xff] %vm462, %v461
          %v464 = vld [vmem:[%s271] sm:$0xff]
          %v465 = vmul.f32 %v452, %v461
          %v466 = vsub.f32 %v464, %v465
          %467 = vst.msk [vmem:[#allocation7] sm:$0xff] %vm462, %v466
        $region48: #{tpu_custom_call.1} parent=35 // pred_fallthru
          _
        // Predicated region
        $region49: #{tpu_custom_call.1} parent=35 // pred_check
          %p468 = pneg %p446
        $region50: #{tpu_custom_call.1} parent=35 // pred_check_branch
          %470 = sbr.rel (%p468) target = $region52
        $region51: #{tpu_custom_call.1} parent=35 // pred_region
          %v471 = vld [vmem:[#allocation6] sm:$0xff]
          %473 = vset.pattern.permute.xlu0 0
          %474 = vperm.xlu0 %473, %v471
          %v475 = vpop.permute.xlu0 %474
          %v477 = vmul.f32 %v413, %v475
          %v478 = vld [vmem:[#allocation7] sm:$0xff]
          %480 = vset.pattern.permute.xlu0 0
          %481 = vperm.xlu0 %480, %v478
          %v482 = vpop.permute.xlu0 %481
          %v484 = vadd.f32 %v477, %v482
          %v485 = vmax.f32 %v484, 0.0
          %vm486 = vcmask 130048
          %487 = vst.msk [vmem:[%s253] sm:$0xff] %vm486, %v485
          %489 = vrot.lane.b32.xlu0 %v485, 112
          %v490 = vpop.permute.xlu0 %489
          %s492 = scalar_lea.vmem %s253, 8 [#allocation8]
          %493 = vst.msk [vmem:[%s492] sm:$0xff] %vm486, %v490
        $region52: #{tpu_custom_call.1} parent=35 // pred_fallthru
          _
        %s494 = sand.u32 %s153, 1
        %s495 = scalar_lea.sflag [#allocation9], %s494
        %s496 = sand.u32 %s153, 1
        %s497 = smul.addr %s496, 16
        %s498 = scalar_lea.vmem [#allocation8], %s497
        // Predicated region
        $region53: #{tpu_custom_call.1} parent=35 // pred_check
          %p499 = pneg %p163
        $region54: #{tpu_custom_call.1} parent=35 // pred_check_branch
          %501 = sbr.rel (%p499) target = $region56
        $region55: #{tpu_custom_call.1} parent=35 // pred_region
          %s502 = smul.u32 %s25, %s24
          %s503 = smul.u32 2, %s502
          %s505 = ssub.s32 256, 256
          %506 = vsyncadd %s495, %s505
          %s507 = sadd.s32 %s23, %s503
          %s508 = smul.addr %s507, 128
          %s509 = scalar_lea.hbm %s4, %s508
          %s510 = sshll.u32 %s498, 4
          %s511 = int_to_ptr.vmem [resolvable:$true] %s510
          %516 = dma.vmem_to_hbm [thread:$0]  %s511, 256, %s509, %s495, 128, 128, 8
        $region56: #{tpu_custom_call.1} parent=35 // pred_fallthru
          _
      $region36: #{tpu_custom_call.1} parent=5 // pred_fallthru
        _
      %p517 = scmp.le.s32.totalorder 2, %s13
      // Predicated region
      $region57: #{tpu_custom_call.1} parent=5 // pred_check
        %p518 = pneg %p517
      $region58: #{tpu_custom_call.1} parent=5 // pred_check_branch
        %520 = sbr.rel (%p518) target = $region60
      $region59: #{tpu_custom_call.1} parent=5 // pred_region
        %s521 = ssub.s32 %s13, 2
        // Predicated region
        $region61: #{tpu_custom_call.1} parent=59 // pred_check
          %p522 = pneg %p169
        $region62: #{tpu_custom_call.1} parent=59 // pred_check_branch
          %524 = sbr.rel (%p522) target = $region64
        $region63: #{tpu_custom_call.1} parent=59 // pred_region
          %s525 = sand.u32 %s154, 1
          %s526 = scalar_lea.sflag [#allocation9], %s525
          %s527 = sand.u32 %s154, 1
          %s528 = smul.addr %s527, 16
          %s529 = scalar_lea.vmem [#allocation8], %s528
          %530 = dma.done %s526, 256
        $region64: #{tpu_custom_call.1} parent=59 // pred_fallthru
          _
      $region60: #{tpu_custom_call.1} parent=5 // pred_fallthru
        _
    $region6: #{tpu_custom_call.1} parent=1 // loop_footer
      %s17 = sadd.s32 1, %s13
    $region7: #{tpu_custom_call.1} parent=1 // loop_footer_branch
      %12 = sbr.rel target = $region3
    $region8: #{tpu_custom_call.1} parent=1 // loop_exit
      _
    %531 = vsyncpa [#allocation9], 1
    %s532 = scalar_lea.sflag [#allocation9], 1
    %533 = vsyncpa %s532, 1

</llo_original>
